<compile_context>
chip_gen: v7x
topology: tpu7x:2x2x1
jax: 0.10.0
libtpu: 0.0.40
codegen_flags: <defaults>
</compile_context>

<pallas_src>
import functools

import jax
import jax.numpy as jnp
from jax.experimental import pallas as pl
from jax.experimental.pallas import tpu as pltpu

_LANE = 128


def fused_sage_kernel(*refs, n_layers, dst_counts):
    """refs = (x_ref, [adj_l, w_cat_l, bias_l] * n_layers, out_ref).

    adj_l    : (n_dst_l, n_src_l) bf16, rows 1/deg-normalized -> matmul == mean agg
    w_cat_l  : (2*in_f_l, out_f_l) bf16 == concat([W_self; W_neigh], axis=0)
    bias_l   : (1, out_f_l) f32
    """
    x_ref = refs[0]
    out_ref = refs[-1]
    layer_refs = refs[1:-1]

    h = x_ref[...].astype(jnp.float32)                      # (n_src0, in_f0)
    for l in range(n_layers):
        adj_ref, w_cat_ref, bias_ref = layer_refs[3 * l:3 * l + 3]
        n_dst = dst_counts[l]

        # Mean aggregation over in-neighbors (adjacency pre-normalized by 1/deg).
        h_neigh = jnp.dot(adj_ref[...], h.astype(jnp.bfloat16),
                          preferred_element_type=jnp.float32)   # (n_dst, in_f)
        h_self = h[:n_dst, :]                   # dst nodes = first n_dst src nodes

        # Single K-concatenated matmul == h_self @ W_self + h_neigh @ W_neigh.
        h_cat = jnp.concatenate([h_self, h_neigh], axis=1).astype(jnp.bfloat16)
        h = (jnp.dot(h_cat, w_cat_ref[...],
                     preferred_element_type=jnp.float32)
             + bias_ref[...].astype(jnp.float32))           # f32 epilogue

        if l != n_layers - 1:
            h = jnp.maximum(h, 0.0)
        # TODO(synk): nn.Dropout(0.5) is identity in eval mode; training-mode
        # stochastic dropout (pltpu.prng_random_bits) intentionally not applied.

    out_ref[...] = h.astype(out_ref.dtype)                  # lane-dense (n_dst, 128)


def graphsage_forward(blocks_adj, x, params):
    """blocks_adj: list of (num_dst, num_src) row-normalized adjacencies (f32).
       params: list of (w_self [in,out], w_neigh [in,out], bias [1,out]) in f32."""
    n_layers = len(params)
    assert len(blocks_adj) == n_layers
    out_f = params[-1][0].shape[1]
    dst_counts = tuple(int(a.shape[0]) for a in blocks_adj)

    # Host-side prep: K-concat the self/neigh weights, cast matmul operands to
    # bf16, and pad the last layer to a lane-dense (multiple of 128) output width.
    inputs = [x]
    flops = 0
    for l, (adj, (w_self, w_neigh, bias)) in enumerate(zip(blocks_adj, params)):
        w_cat = jnp.concatenate([w_self, w_neigh], axis=0)       # (2*in_f, out_f)
        b = bias
        if l == n_layers - 1:
            pad = (-w_cat.shape[1]) % _LANE
            if pad:
                w_cat = jnp.pad(w_cat, ((0, 0), (0, pad)))
                b = jnp.pad(b, ((0, 0), (0, pad)))
        n_dst, n_src = adj.shape
        in_f = w_self.shape[0]
        flops += 2 * n_dst * n_src * in_f                        # aggregation
        flops += 2 * n_dst * w_cat.shape[0] * w_cat.shape[1]     # fused linear
        inputs += [adj.astype(jnp.bfloat16),
                   w_cat.astype(jnp.bfloat16),
                   b.astype(jnp.float32)]

    out_f_padded = out_f + (-out_f) % _LANE
    out_shape = jax.ShapeDtypeStruct((dst_counts[-1], out_f_padded), jnp.float32)
    bytes_accessed = sum(int(a.size) * int(a.dtype.itemsize) for a in inputs)
    bytes_accessed += dst_counts[-1] * out_f_padded * 4

    kernel = functools.partial(fused_sage_kernel,
                               n_layers=n_layers, dst_counts=dst_counts)
    vmem_spec = pl.BlockSpec(memory_space=pltpu.MemorySpace.VMEM)

    out_padded = pl.pallas_call(
        kernel,
        out_shape=out_shape,
        in_specs=[vmem_spec] * len(inputs),
        out_specs=vmem_spec,
        cost_estimate=pl.CostEstimate(flops=flops, transcendentals=0,
                                      bytes_accessed=bytes_accessed),
    )(*inputs)
    return out_padded[:, :out_f]


def graphsage_reference(blocks_adj, x, params):
    """Pure-JAX f32 reference of the same forward pass (for a sanity check)."""
    h = x
    n_layers = len(params)
    for l, (adj, (w_self, w_neigh, bias)) in enumerate(zip(blocks_adj, params)):
        n_dst = adj.shape[0]
        h_neigh = adj @ h
        h = h[:n_dst] @ w_self + h_neigh @ w_neigh + bias
        if l != n_layers - 1:
            h = jnp.maximum(h, 0.0)
    return h


def _make_block(key, n_dst, n_src):
    a = (jax.random.uniform(key, (n_dst, n_src)) < 0.3).astype(jnp.float32)
    deg = jnp.maximum(a.sum(axis=1, keepdims=True), 1.0)
    return a / deg   # row-normalized -> matmul == mean over neighbors


def _make_linear_params(key, in_f, out_f):
    k1, k2, k3 = jax.random.split(key, 3)
    scale = 1.0 / jnp.sqrt(jnp.float32(in_f))
    w_self = jax.random.normal(k1, (in_f, out_f), jnp.float32) * scale
    w_neigh = jax.random.normal(k2, (in_f, out_f), jnp.float32) * scale
    bias = jax.random.normal(k3, (1, out_f), jnp.float32) * 0.01
    return w_self, w_neigh, bias


if __name__ == "__main__":
    # GraphSAGE_DGL(in_size=16, hid_size=32, out_size=8, num_layers=3, ...)
    in_size, hid_size, out_size, num_layers = 16, 32, 8, 3
    # Node counts per MFG block (src -> dst), DGL sampled-blocks style.
    node_counts = [64, 32, 16, 8]   # block l: src=node_counts[l], dst=node_counts[l+1]

    root = jax.random.PRNGKey(0)
    k_feat, k_blocks, k_params = jax.random.split(root, 3)

    # Input features for all src nodes of the first block.
    x = jax.random.normal(k_feat, (node_counts[0], in_size), jnp.float32)

    # Dense row-normalized adjacencies for each block.
    bkeys = jax.random.split(k_blocks, num_layers)
    blocks_adj = [_make_block(bkeys[l], node_counts[l + 1], node_counts[l])
                  for l in range(num_layers)]

    # Layer parameter shapes: in->hid, hid->hid, hid->out.
    dims = [in_size] + [hid_size] * (num_layers - 1) + [out_size]
    pkeys = jax.random.split(k_params, num_layers)
    params = [_make_linear_params(pkeys[l], dims[l], dims[l + 1])
              for l in range(num_layers)]

    out = graphsage_forward(blocks_adj, x, params)
    out = jax.block_until_ready(out)
    assert out.shape == (node_counts[-1], out_size), out.shape

    # Sanity check vs. f32 reference (bf16 MXU inputs + f32 accumulation).
    ref = graphsage_reference(blocks_adj, x, params)
    max_err = float(jnp.max(jnp.abs(out - ref)))
    assert max_err < 0.1, f"max abs error vs f32 reference: {max_err}"

    print("KERNEL_OK")
</pallas_src>

<mosaic_0001>
module attributes {stable_mosaic.version = 11 : i64} {
  func.func @fused_sage_kernel(%arg0: memref<64x16xf32, #tpu.memory_space<vmem>>, %arg1: memref<32x64xbf16, #tpu.memory_space<vmem>>, %arg2: memref<32x32xbf16, #tpu.memory_space<vmem>>, %arg3: memref<1x32xf32, #tpu.memory_space<vmem>>, %arg4: memref<16x32xbf16, #tpu.memory_space<vmem>>, %arg5: memref<64x32xbf16, #tpu.memory_space<vmem>>, %arg6: memref<1x32xf32, #tpu.memory_space<vmem>>, %arg7: memref<8x16xbf16, #tpu.memory_space<vmem>>, %arg8: memref<64x128xbf16, #tpu.memory_space<vmem>>, %arg9: memref<1x128xf32, #tpu.memory_space<vmem>>, %arg10: memref<8x128xf32, #tpu.memory_space<vmem>>) attributes {dimension_semantics = [], scalar_prefetch = 0 : i64, scratch_operands = 0 : i64, tpu.core_type = #tpu.core_type<tc>} {
    %c0 = arith.constant 0 : index
    %c0_0 = arith.constant 0 : index
    %0 = vector.load %arg0[%c0, %c0_0] : memref<64x16xf32, #tpu.memory_space<vmem>>, vector<64x16xf32>
    %c0_1 = arith.constant 0 : index
    %c0_2 = arith.constant 0 : index
    %1 = vector.load %arg1[%c0_1, %c0_2] : memref<32x64xbf16, #tpu.memory_space<vmem>>, vector<32x64xbf16>
    %2 = arith.truncf %0 : vector<64x16xf32> to vector<64x16xbf16>
    %cst = arith.constant dense<0.000000e+00> : vector<32x16xf32>
    %3 = tpu.matmul %1, %2, %cst {dimension_numbers = #tpu.dot_dimension_numbers<[1], [0], [0], [1], [0, 0, 1, 1], [], []>} : vector<32x64xbf16>, vector<64x16xbf16>, vector<32x16xf32> -> vector<32x16xf32>
    %4 = vector.extract_strided_slice %0 {offsets = [0, 0], sizes = [32, 16], strides = [1, 1]} : vector<64x16xf32> to vector<32x16xf32>
    %5 = tpu.concatenate %4, %3 in 1 : vector<32x16xf32>, vector<32x16xf32> -> vector<32x32xf32>
    %6 = arith.truncf %5 : vector<32x32xf32> to vector<32x32xbf16>
    %c0_3 = arith.constant 0 : index
    %c0_4 = arith.constant 0 : index
    %7 = vector.load %arg2[%c0_3, %c0_4] : memref<32x32xbf16, #tpu.memory_space<vmem>>, vector<32x32xbf16>
    %cst_5 = arith.constant dense<0.000000e+00> : vector<32x32xf32>
    %8 = tpu.matmul %6, %7, %cst_5 {dimension_numbers = #tpu.dot_dimension_numbers<[1], [0], [0], [1], [0, 0, 1, 1], [], []>} : vector<32x32xbf16>, vector<32x32xbf16>, vector<32x32xf32> -> vector<32x32xf32>
    %c0_6 = arith.constant 0 : index
    %c0_7 = arith.constant 0 : index
    %9 = vector.load %arg3[%c0_6, %c0_7] : memref<1x32xf32, #tpu.memory_space<vmem>>, vector<1x32xf32>
    %10 = vector.broadcast %9 : vector<1x32xf32> to vector<32x32xf32>
    %11 = arith.addf %8, %10 : vector<32x32xf32>
    %cst_8 = arith.constant 0.000000e+00 : f32
    %12 = vector.broadcast %cst_8 : f32 to vector<32x32xf32>
    %13 = arith.maximumf %11, %12 : vector<32x32xf32>
    %c0_9 = arith.constant 0 : index
    %c0_10 = arith.constant 0 : index
    %14 = vector.load %arg4[%c0_9, %c0_10] : memref<16x32xbf16, #tpu.memory_space<vmem>>, vector<16x32xbf16>
    %15 = arith.truncf %13 : vector<32x32xf32> to vector<32x32xbf16>
    %cst_11 = arith.constant dense<0.000000e+00> : vector<16x32xf32>
    %16 = tpu.matmul %14, %15, %cst_11 {dimension_numbers = #tpu.dot_dimension_numbers<[1], [0], [0], [1], [0, 0, 1, 1], [], []>} : vector<16x32xbf16>, vector<32x32xbf16>, vector<16x32xf32> -> vector<16x32xf32>
    %17 = vector.extract_strided_slice %13 {offsets = [0, 0], sizes = [16, 32], strides = [1, 1]} : vector<32x32xf32> to vector<16x32xf32>
    %18 = tpu.concatenate %17, %16 in 1 : vector<16x32xf32>, vector<16x32xf32> -> vector<16x64xf32>
    %19 = arith.truncf %18 : vector<16x64xf32> to vector<16x64xbf16>
    %c0_12 = arith.constant 0 : index
    %c0_13 = arith.constant 0 : index
    %20 = vector.load %arg5[%c0_12, %c0_13] : memref<64x32xbf16, #tpu.memory_space<vmem>>, vector<64x32xbf16>
    %cst_14 = arith.constant dense<0.000000e+00> : vector<16x32xf32>
    %21 = tpu.matmul %19, %20, %cst_14 {dimension_numbers = #tpu.dot_dimension_numbers<[1], [0], [0], [1], [0, 0, 1, 1], [], []>} : vector<16x64xbf16>, vector<64x32xbf16>, vector<16x32xf32> -> vector<16x32xf32>
    %c0_15 = arith.constant 0 : index
    %c0_16 = arith.constant 0 : index
    %22 = vector.load %arg6[%c0_15, %c0_16] : memref<1x32xf32, #tpu.memory_space<vmem>>, vector<1x32xf32>
    %23 = vector.broadcast %22 : vector<1x32xf32> to vector<16x32xf32>
    %24 = arith.addf %21, %23 : vector<16x32xf32>
    %cst_17 = arith.constant 0.000000e+00 : f32
    %25 = vector.broadcast %cst_17 : f32 to vector<16x32xf32>
    %26 = arith.maximumf %24, %25 : vector<16x32xf32>
    %c0_18 = arith.constant 0 : index
    %c0_19 = arith.constant 0 : index
    %27 = vector.load %arg7[%c0_18, %c0_19] : memref<8x16xbf16, #tpu.memory_space<vmem>>, vector<8x16xbf16>
    %28 = arith.truncf %26 : vector<16x32xf32> to vector<16x32xbf16>
    %cst_20 = arith.constant dense<0.000000e+00> : vector<8x32xf32>
    %29 = tpu.matmul %27, %28, %cst_20 {dimension_numbers = #tpu.dot_dimension_numbers<[1], [0], [0], [1], [0, 0, 1, 1], [], []>} : vector<8x16xbf16>, vector<16x32xbf16>, vector<8x32xf32> -> vector<8x32xf32>
    %30 = vector.extract_strided_slice %26 {offsets = [0, 0], sizes = [8, 32], strides = [1, 1]} : vector<16x32xf32> to vector<8x32xf32>
    %31 = tpu.concatenate %30, %29 in 1 : vector<8x32xf32>, vector<8x32xf32> -> vector<8x64xf32>
    %32 = arith.truncf %31 : vector<8x64xf32> to vector<8x64xbf16>
    %c0_21 = arith.constant 0 : index
    %c0_22 = arith.constant 0 : index
    %33 = vector.load %arg8[%c0_21, %c0_22] : memref<64x128xbf16, #tpu.memory_space<vmem>>, vector<64x128xbf16>
    %cst_23 = arith.constant dense<0.000000e+00> : vector<8x128xf32>
    %34 = tpu.matmul %32, %33, %cst_23 {dimension_numbers = #tpu.dot_dimension_numbers<[1], [0], [0], [1], [0, 0, 1, 1], [], []>} : vector<8x64xbf16>, vector<64x128xbf16>, vector<8x128xf32> -> vector<8x128xf32>
    %c0_24 = arith.constant 0 : index
    %c0_25 = arith.constant 0 : index
    %35 = vector.load %arg9[%c0_24, %c0_25] : memref<1x128xf32, #tpu.memory_space<vmem>>, vector<1x128xf32>
    %36 = vector.broadcast %35 : vector<1x128xf32> to vector<8x128xf32>
    %37 = arith.addf %34, %36 : vector<8x128xf32>
    %c0_26 = arith.constant 0 : index
    %c0_27 = arith.constant 0 : index
    %38 = vector.load %arg10[%c0_26, %c0_27] : memref<8x128xf32, #tpu.memory_space<vmem>>, vector<8x128xf32>
    tpu.vector_store %arg10[%c0_26, %c0_27], %37 {strides = array<i32>} : memref<8x128xf32, #tpu.memory_space<vmem>>, vector<8x128xf32>,
    return
  }
}

</mosaic_0001>

<llo_original>
// kernel: tpu_custom_call.1
$region0: #{tpu_custom_call.1}
  #allocation0 [shape = 'u32[]', space=smem, size = 0x4, offset = 0x4, fixed_abs, tag = 'smem constant byte address 0x4 - core index']
  #allocation1 [shape = 'u32[144,128]{1,0:T(1,128)}', space=vmem, size = 0x12000, scoped, tag = 'internal scratch']
  %s0 = inlined_call_operand.vmem [shape: f32[64,16], index: 0, kind: input, shape index: {}]
  %s1 = inlined_call_operand.vmem [shape: bf16[32,64], index: 1, kind: input, shape index: {}]
  %s2 = inlined_call_operand.vmem [shape: bf16[32,32], index: 2, kind: input, shape index: {}]
  %s3 = inlined_call_operand.vmem [shape: f32[1,32], index: 3, kind: input, shape index: {}]
  %s4 = inlined_call_operand.vmem [shape: bf16[16,32], index: 4, kind: input, shape index: {}]
  %s5 = inlined_call_operand.vmem [shape: bf16[64,32], index: 5, kind: input, shape index: {}]
  %s6 = inlined_call_operand.vmem [shape: f32[1,32], index: 6, kind: input, shape index: {}]
  %s7 = inlined_call_operand.vmem [shape: bf16[8,16], index: 7, kind: input, shape index: {}]
  %s8 = inlined_call_operand.vmem [shape: bf16[64,128], index: 8, kind: input, shape index: {}]
  %s9 = inlined_call_operand.vmem [shape: f32[1,128], index: 9, kind: input, shape index: {}]
  %s10 = inlined_call_operand.hbm [shape: f32[8,128], index: 10, kind: output, shape index: {}]
  %s11 = sld [smem:[#allocation0]]
  $region50: #{tpu_custom_call.1} parent=0
    _
  %s13 = ssub.s32 1, %s11
  %s14 = scalar_select 0, %s13, %s11
  $region1: #{tpu_custom_call.1} parent=0
    #allocation2 [shape = 'u8[4096]{0}', space=vmem, size = 0x1000, scoped, tag = 'output window, operand 0, single buffered']
    #allocation3 [shape = 's32[1]{0}', space=sflag, size = 0x4, scoped, tag = 'scoped memory for tpu_custom_call.1']
    %15 = vsyncpa [#allocation3], 0
    // Predicated region
    $region2: #{tpu_custom_call.1} parent=1 // pred_check
      _
    $region3: #{tpu_custom_call.1} parent=1 // pred_check_branch
      %17 = sbr.rel (0) target = $region5
    $region4: #{tpu_custom_call.1} parent=1 // pred_region
      _
    $region5: #{tpu_custom_call.1} parent=1 // pred_fallthru
      _
    // Predicated region
    $region6: #{tpu_custom_call.1} parent=1 // pred_check
      _
    $region7: #{tpu_custom_call.1} parent=1 // pred_check_branch
      %19 = sbr.rel (0) target = $region9
    $region8: #{tpu_custom_call.1} parent=1 // pred_region
      _
    $region9: #{tpu_custom_call.1} parent=1 // pred_fallthru
      _
    // Predicated region
    $region10: #{tpu_custom_call.1} parent=1 // pred_check
      _
    $region11: #{tpu_custom_call.1} parent=1 // pred_check_branch
      %21 = sbr.rel (0) target = $region13
    $region12: #{tpu_custom_call.1} parent=1 // pred_region
      _
    $region13: #{tpu_custom_call.1} parent=1 // pred_fallthru
      _
    // Predicated region
    $region14: #{tpu_custom_call.1} parent=1 // pred_check
      _
    $region15: #{tpu_custom_call.1} parent=1 // pred_check_branch
      %23 = sbr.rel (0) target = $region17
    $region16: #{tpu_custom_call.1} parent=1 // pred_region
      _
    $region17: #{tpu_custom_call.1} parent=1 // pred_fallthru
      _
    // Predicated region
    $region18: #{tpu_custom_call.1} parent=1 // pred_check
      _
    $region19: #{tpu_custom_call.1} parent=1 // pred_check_branch
      %25 = sbr.rel (0) target = $region21
    $region20: #{tpu_custom_call.1} parent=1 // pred_region
      _
    $region21: #{tpu_custom_call.1} parent=1 // pred_fallthru
      _
    // Predicated region
    $region22: #{tpu_custom_call.1} parent=1 // pred_check
      _
    $region23: #{tpu_custom_call.1} parent=1 // pred_check_branch
      %27 = sbr.rel (0) target = $region25
    $region24: #{tpu_custom_call.1} parent=1 // pred_region
      _
    $region25: #{tpu_custom_call.1} parent=1 // pred_fallthru
      _
    // Predicated region
    $region26: #{tpu_custom_call.1} parent=1 // pred_check
      _
    $region27: #{tpu_custom_call.1} parent=1 // pred_check_branch
      %29 = sbr.rel (0) target = $region29
    $region28: #{tpu_custom_call.1} parent=1 // pred_region
      _
    $region29: #{tpu_custom_call.1} parent=1 // pred_fallthru
      _
    // Predicated region
    $region30: #{tpu_custom_call.1} parent=1 // pred_check
      _
    $region31: #{tpu_custom_call.1} parent=1 // pred_check_branch
      %31 = sbr.rel (0) target = $region33
    $region32: #{tpu_custom_call.1} parent=1 // pred_region
      _
    $region33: #{tpu_custom_call.1} parent=1 // pred_fallthru
      _
    // Predicated region
    $region34: #{tpu_custom_call.1} parent=1 // pred_check
      _
    $region35: #{tpu_custom_call.1} parent=1 // pred_check_branch
      %33 = sbr.rel (0) target = $region37
    $region36: #{tpu_custom_call.1} parent=1 // pred_region
      _
    $region37: #{tpu_custom_call.1} parent=1 // pred_fallthru
      _
    // Predicated region
    $region38: #{tpu_custom_call.1} parent=1 // pred_check
      _
    $region39: #{tpu_custom_call.1} parent=1 // pred_check_branch
      %35 = sbr.rel (0) target = $region41
    $region40: #{tpu_custom_call.1} parent=1 // pred_region
      _
    $region41: #{tpu_custom_call.1} parent=1 // pred_fallthru
      _
    %v37 = vld [vmem:[%s0] sm:$0xff]
    %v38 = vld [vmem:[%s0 + $0x8] sm:$0xff]
    %v39 = vld [vmem:[%s0 + $0x10] sm:$0xff]
    %v40 = vld [vmem:[%s0 + $0x18] sm:$0xff]
    %v41 = vld [vmem:[%s0 + $0x20] sm:$0xff]
    %v42 = vld [vmem:[%s0 + $0x28] sm:$0xff]
    %v43 = vld [vmem:[%s0 + $0x30] sm:$0xff]
    %v44 = vld [vmem:[%s0 + $0x38] sm:$0xff]
    %v45 = vld [vmem:[%s1] sm:$0xf]
    %v46 = vld [vmem:[%s1 + $0x4] sm:$0xf]
    %v47 = vld [vmem:[%s1 + $0x8] sm:$0xf]
    %v48 = vld [vmem:[%s1 + $0xc] sm:$0xf]
    %v49 = vpack.c.bf16 %v38, %v37
    %v50 = vpack.c.bf16 %v40, %v39
    %v51 = vpack.c.bf16 %v42, %v41
    %v52 = vpack.c.bf16 %v44, %v43
    %v57 = vunpack.c.l.b16 %v45
    %v58 = vunpack.c.l.b16 %v46
    %v59 = vunpack.c.l.b16 %v47
    %v60 = vunpack.c.l.b16 %v48
    %v61 = vpack.c.b16 %v58, %v57
    %v62 = vpack.c.b16 %v60, %v59
    %vm63 = vcmask 523264
    %v65 = vsel %vm63, %v61, 0
    %v68 = vsel %vm63, %v62, 0
    %70 = vmatprep.subr.bf16.mxu0 0
    %71 = vmatpush1.bf16.msra.mxu0 %v49
    %72 = vmatprep.subr.bf16.mxu0 0
    %73 = vmatpush1.bf16.msra.mxu0 %v50
    %74 = vmatprep.subr.bf16.mxu0 0
    %75 = vmatpush1.bf16.msra.mxu0 %v51
    %76 = vmatprep.subr.bf16.mxu0 0
    %77 = vmatpush1.bf16.msra.mxu0 %v52
    %78 = vmatprep.subr.bf16.mxu0 0
    %79 = vmatpush1.bf16.msra.mxu0 0
    %80 = vmatprep.subr.bf16.mxu0 0
    %81 = vmatpush1.bf16.msra.mxu0 0
    %82 = vmatprep.subr.bf16.mxu0 0
    %83 = vmatpush1.bf16.msra.mxu0 0
    %84 = vmatprep.subr.bf16.mxu0 0
    %85 = vmatpush1.bf16.msra.mxu0 0
    %86 = vmatprep.subr.bf16.mxu0 0
    %87 = vmatpush1.bf16.msra.mxu0 0
    %88 = vmatprep.subr.bf16.mxu0 0
    %89 = vmatpush1.bf16.msra.mxu0 0
    %90 = vmatprep.subr.bf16.mxu0 0
    %91 = vmatpush1.bf16.msra.mxu0 0
    %92 = vmatprep.subr.bf16.mxu0 0
    %93 = vmatpush1.bf16.msra.mxu0 0
    %94 = vmatprep.subr.bf16.mxu0 0
    %95 = vmatpush1.bf16.msra.mxu0 0
    %96 = vmatprep.subr.bf16.mxu0 0
    %97 = vmatpush1.bf16.msra.mxu0 0
    %98 = vmatprep.subr.bf16.mxu0 0
    %99 = vmatpush1.bf16.msra.mxu0 0
    %100 = vmatprep.subr.bf16.mxu0 0
    %101 = vmatpush1.bf16.msra.mxu0 0
    %102 = vmatprep.mubr.bf16.mxu0 0
    %103 = vmatmul.mubr.bf16.gmra.mrb[0].mxu0 %v65
    %v104 = vpop.f32.mrb[0].mxu0
    %v105 = vadd.f32 0.0, %v104
    %v106 = vpop.f32.mrb[0].mxu0
    %v107 = vpop.f32.mrb[0].mxu0
    %v108 = vadd.f32 0.0, %v107
    %v109 = vpop.f32.mrb[0].mxu0
    %110 = vmatprep.mubr.bf16.mxu0 0
    %111 = vmatmul.mubr.bf16.gmra.mrb[0].mxu0 %v68
    %v112 = vpop.f32.mrb[0].mxu0
    %v113 = vadd.f32 0.0, %v112
    %v114 = vpop.f32.mrb[0].mxu0
    %v115 = vpop.f32.mrb[0].mxu0
    %v116 = vadd.f32 0.0, %v115
    %v117 = vpop.f32.mrb[0].mxu0
    %118 = vdwg.mxu0
    %123 = vrot.lane.b32.xlu0 %v105, 16
    %v124 = vpop.permute.xlu0 %123
    %125 = vrot.lane.b32.xlu0 %v108, 16
    %v126 = vpop.permute.xlu0 %125
    %127 = vrot.lane.b32.xlu0 %v113, 16
    %v128 = vpop.permute.xlu0 %127
    %129 = vrot.lane.b32.xlu0 %v116, 16
    %v130 = vpop.permute.xlu0 %129
    %vm135 = vcmask 130048
    %v136 = vsel %vm135, %v37, %v124
    %v137 = vsel %vm135, %v38, %v126
    %v138 = vsel %vm135, %v39, %v128
    %v139 = vsel %vm135, %v40, %v130
    %v140 = vpack.c.bf16 %v137, %v136
    %v141 = vpack.c.bf16 %v139, %v138
    %v142 = vld [vmem:[%s2] sm:$0xf]
    %v143 = vld [vmem:[%s2 + $0x4] sm:$0xf]
    %v144 = vld [vmem:[%s2 + $0x8] sm:$0xf]
    %v145 = vld [vmem:[%s2 + $0xc] sm:$0xf]
    %v146 = vld [vmem:[%s3] sm:$0x1]
    %v148 = vlaneseq
    %v149 = vshrl.u32 %v148, 7
    %v150 = vsub.s32 0, %v149
    %v151 = vrot.slane %v146, %v150
    %v157 = vunpack.c.l.b16 %v142
    %v158 = vunpack.c.l.b16 %v143
    %v159 = vunpack.c.l.b16 %v144
    %v160 = vunpack.c.l.b16 %v145
    %v161 = vpack.c.b16 %v158, %v157
    %v162 = vpack.c.b16 %v160, %v159
    %vm165 = vcmask 261120
    %v167 = vsel %vm165, %v140, 0
    %v170 = vsel %vm165, %v141, 0
    %172 = vmatprep.subr.bf16.mxu0 0
    %173 = vmatpush1.bf16.msra.mxu0 %v161
    %174 = vmatprep.subr.bf16.mxu0 0
    %175 = vmatpush1.bf16.msra.mxu0 %v162
    %176 = vmatprep.subr.bf16.mxu0 0
    %177 = vmatpush1.bf16.msra.mxu0 0
    %178 = vmatprep.subr.bf16.mxu0 0
    %179 = vmatpush1.bf16.msra.mxu0 0
    %180 = vmatprep.subr.bf16.mxu0 0
    %181 = vmatpush1.bf16.msra.mxu0 0
    %182 = vmatprep.subr.bf16.mxu0 0
    %183 = vmatpush1.bf16.msra.mxu0 0
    %184 = vmatprep.subr.bf16.mxu0 0
    %185 = vmatpush1.bf16.msra.mxu0 0
    %186 = vmatprep.subr.bf16.mxu0 0
    %187 = vmatpush1.bf16.msra.mxu0 0
    %188 = vmatprep.subr.bf16.mxu0 0
    %189 = vmatpush1.bf16.msra.mxu0 0
    %190 = vmatprep.subr.bf16.mxu0 0
    %191 = vmatpush1.bf16.msra.mxu0 0
    %192 = vmatprep.subr.bf16.mxu0 0
    %193 = vmatpush1.bf16.msra.mxu0 0
    %194 = vmatprep.subr.bf16.mxu0 0
    %195 = vmatpush1.bf16.msra.mxu0 0
    %196 = vmatprep.subr.bf16.mxu0 0
    %197 = vmatpush1.bf16.msra.mxu0 0
    %198 = vmatprep.subr.bf16.mxu0 0
    %199 = vmatpush1.bf16.msra.mxu0 0
    %200 = vmatprep.subr.bf16.mxu0 0
    %201 = vmatpush1.bf16.msra.mxu0 0
    %202 = vmatprep.subr.bf16.mxu0 0
    %203 = vmatpush1.bf16.msra.mxu0 0
    %204 = vmatprep.mubr.bf16.mxu0 0
    %205 = vmatmul.mubr.bf16.gmra.mrb[0].mxu0 %v167
    %v206 = vpop.f32.mrb[0].mxu0
    %v207 = vadd.f32 %v151, %v206
    %v208 = vpop.f32.mrb[0].mxu0
    %v209 = vpop.f32.mrb[0].mxu0
    %v210 = vadd.f32 %v151, %v209
    %v211 = vpop.f32.mrb[0].mxu0
    %212 = vmatprep.mubr.bf16.mxu0 0
    %213 = vmatmul.mubr.bf16.gmra.mrb[0].mxu0 %v170
    %v214 = vpop.f32.mrb[0].mxu0
    %v215 = vadd.f32 %v151, %v214
    %v216 = vpop.f32.mrb[0].mxu0
    %v217 = vpop.f32.mrb[0].mxu0
    %v218 = vadd.f32 %v151, %v217
    %v219 = vpop.f32.mrb[0].mxu0
    %220 = vdwg.mxu0
    %v221 = vmax.f32 %v207, 0.0
    %v222 = vmax.f32 %v210, 0.0
    %v223 = vmax.f32 %v215, 0.0
    %v224 = vmax.f32 %v218, 0.0
    %v225 = vld [vmem:[%s4] sm:$0xf]
    %v226 = vld [vmem:[%s4 + $0x4] sm:$0xf]
    %v227 = vpack.c.bf16 %v222, %v221
    %v228 = vpack.c.bf16 %v224, %v223
    %v231 = vunpack.c.l.b16 %v225
    %v232 = vunpack.c.l.b16 %v226
    %v233 = vpack.c.b16 %v232, %v231
    %v235 = vsel %vm165, %v233, 0
    %237 = vmatprep.subr.bf16.mxu0 0
    %238 = vmatpush1.bf16.msra.mxu0 %v227
    %239 = vmatprep.subr.bf16.mxu0 0
    %240 = vmatpush1.bf16.msra.mxu0 %v228
    %241 = vmatprep.subr.bf16.mxu0 0
    %242 = vmatpush1.bf16.msra.mxu0 0
    %243 = vmatprep.subr.bf16.mxu0 0
    %244 = vmatpush1.bf16.msra.mxu0 0
    %245 = vmatprep.subr.bf16.mxu0 0
    %246 = vmatpush1.bf16.msra.mxu0 0
    %247 = vmatprep.subr.bf16.mxu0 0
    %248 = vmatpush1.bf16.msra.mxu0 0
    %249 = vmatprep.subr.bf16.mxu0 0
    %250 = vmatpush1.bf16.msra.mxu0 0
    %251 = vmatprep.subr.bf16.mxu0 0
    %252 = vmatpush1.bf16.msra.mxu0 0
    %253 = vmatprep.subr.bf16.mxu0 0
    %254 = vmatpush1.bf16.msra.mxu0 0
    %255 = vmatprep.subr.bf16.mxu0 0
    %256 = vmatpush1.bf16.msra.mxu0 0
    %257 = vmatprep.subr.bf16.mxu0 0
    %258 = vmatpush1.bf16.msra.mxu0 0
    %259 = vmatprep.subr.bf16.mxu0 0
    %260 = vmatpush1.bf16.msra.mxu0 0
    %261 = vmatprep.subr.bf16.mxu0 0
    %262 = vmatpush1.bf16.msra.mxu0 0
    %263 = vmatprep.subr.bf16.mxu0 0
    %264 = vmatpush1.bf16.msra.mxu0 0
    %265 = vmatprep.subr.bf16.mxu0 0
    %266 = vmatpush1.bf16.msra.mxu0 0
    %267 = vmatprep.subr.bf16.mxu0 0
    %268 = vmatpush1.bf16.msra.mxu0 0
    %269 = vmatprep.mubr.bf16.mxu0 0
    %270 = vmatmul.mubr.bf16.gmra.mrb[0].mxu0 %v235
    %v271 = vpop.f32.mrb[0].mxu0
    %v272 = vadd.f32 0.0, %v271
    %v273 = vpop.f32.mrb[0].mxu0
    %v274 = vpop.f32.mrb[0].mxu0
    %v275 = vadd.f32 0.0, %v274
    %v276 = vpop.f32.mrb[0].mxu0
    %277 = vdwg.mxu0
    %280 = vrot.lane.b32.xlu0 %v272, 32
    %v281 = vpop.permute.xlu0 %280
    %282 = vrot.lane.b32.xlu0 %v275, 32
    %v283 = vpop.permute.xlu0 %282
    %v286 = vsel %vm165, %v221, %v281
    %v287 = vsel %vm165, %v222, %v283
    %v288 = vpack.c.bf16 %v287, %v286
    %v289 = vld [vmem:[%s5] sm:$0xf]
    %v290 = vld [vmem:[%s5 + $0x4] sm:$0xf]
    %v291 = vld [vmem:[%s5 + $0x8] sm:$0xf]
    %v292 = vld [vmem:[%s5 + $0xc] sm:$0xf]
    %v293 = vld [vmem:[%s5 + $0x10] sm:$0xf]
    %v294 = vld [vmem:[%s5 + $0x14] sm:$0xf]
    %v295 = vld [vmem:[%s5 + $0x18] sm:$0xf]
    %v296 = vld [vmem:[%s5 + $0x1c] sm:$0xf]
    %v297 = vld [vmem:[%s6] sm:$0x1]
    %v299 = vlaneseq
    %v300 = vshrl.u32 %v299, 7
    %v301 = vsub.s32 0, %v300
    %v302 = vrot.slane %v297, %v301
    %v312 = vunpack.c.l.b16 %v289
    %v313 = vunpack.c.l.b16 %v290
    %v314 = vunpack.c.l.b16 %v291
    %v315 = vunpack.c.l.b16 %v292
    %v316 = vunpack.c.l.b16 %v293
    %v317 = vunpack.c.l.b16 %v294
    %v318 = vunpack.c.l.b16 %v295
    %v319 = vunpack.c.l.b16 %v296
    %v320 = vpack.c.b16 %v313, %v312
    %v321 = vpack.c.b16 %v315, %v314
    %v322 = vpack.c.b16 %v317, %v316
    %v323 = vpack.c.b16 %v319, %v318
    %v329 = vsel %vm63, %v288, 0
    %331 = vmatprep.subr.bf16.mxu0 0
    %332 = vmatpush1.bf16.msra.mxu0 %v320
    %333 = vmatprep.subr.bf16.mxu0 0
    %334 = vmatpush1.bf16.msra.mxu0 %v321
    %335 = vmatprep.subr.bf16.mxu0 0
    %336 = vmatpush1.bf16.msra.mxu0 %v322
    %337 = vmatprep.subr.bf16.mxu0 0
    %338 = vmatpush1.bf16.msra.mxu0 %v323
    %339 = vmatprep.subr.bf16.mxu0 0
    %340 = vmatpush1.bf16.msra.mxu0 0
    %341 = vmatprep.subr.bf16.mxu0 0
    %342 = vmatpush1.bf16.msra.mxu0 0
    %343 = vmatprep.subr.bf16.mxu0 0
    %344 = vmatpush1.bf16.msra.mxu0 0
    %345 = vmatprep.subr.bf16.mxu0 0
    %346 = vmatpush1.bf16.msra.mxu0 0
    %347 = vmatprep.subr.bf16.mxu0 0
    %348 = vmatpush1.bf16.msra.mxu0 0
    %349 = vmatprep.subr.bf16.mxu0 0
    %350 = vmatpush1.bf16.msra.mxu0 0
    %351 = vmatprep.subr.bf16.mxu0 0
    %352 = vmatpush1.bf16.msra.mxu0 0
    %353 = vmatprep.subr.bf16.mxu0 0
    %354 = vmatpush1.bf16.msra.mxu0 0
    %355 = vmatprep.subr.bf16.mxu0 0
    %356 = vmatpush1.bf16.msra.mxu0 0
    %357 = vmatprep.subr.bf16.mxu0 0
    %358 = vmatpush1.bf16.msra.mxu0 0
    %359 = vmatprep.subr.bf16.mxu0 0
    %360 = vmatpush1.bf16.msra.mxu0 0
    %361 = vmatprep.subr.bf16.mxu0 0
    %362 = vmatpush1.bf16.msra.mxu0 0
    %363 = vmatprep.mubr.bf16.mxu0 0
    %364 = vmatmul.mubr.bf16.gmra.mrb[0].mxu0 %v329
    %v365 = vpop.f32.mrb[0].mxu0
    %v366 = vadd.f32 %v302, %v365
    %v367 = vpop.f32.mrb[0].mxu0
    %v368 = vpop.f32.mrb[0].mxu0
    %v369 = vadd.f32 %v302, %v368
    %v370 = vpop.f32.mrb[0].mxu0
    %371 = vdwg.mxu0
    %v372 = vmax.f32 %v366, 0.0
    %v373 = vmax.f32 %v369, 0.0
    %v374 = vld [vmem:[%s7] sm:$0xf]
    %v375 = vpack.c.bf16 %v373, %v372
    %v377 = vsel %vm135, %v374, 0
    %379 = vmatprep.subr.bf16.mxu0 0
    %380 = vmatpush1.bf16.msra.mxu0 %v375
    %381 = vmatprep.subr.bf16.mxu0 0
    %382 = vmatpush1.bf16.msra.mxu0 0
    %383 = vmatprep.subr.bf16.mxu0 0
    %384 = vmatpush1.bf16.msra.mxu0 0
    %385 = vmatprep.subr.bf16.mxu0 0
    %386 = vmatpush1.bf16.msra.mxu0 0
    %387 = vmatprep.subr.bf16.mxu0 0
    %388 = vmatpush1.bf16.msra.mxu0 0
    %389 = vmatprep.subr.bf16.mxu0 0
    %390 = vmatpush1.bf16.msra.mxu0 0
    %391 = vmatprep.subr.bf16.mxu0 0
    %392 = vmatpush1.bf16.msra.mxu0 0
    %393 = vmatprep.subr.bf16.mxu0 0
    %394 = vmatpush1.bf16.msra.mxu0 0
    %395 = vmatprep.subr.bf16.mxu0 0
    %396 = vmatpush1.bf16.msra.mxu0 0
    %397 = vmatprep.subr.bf16.mxu0 0
    %398 = vmatpush1.bf16.msra.mxu0 0
    %399 = vmatprep.subr.bf16.mxu0 0
    %400 = vmatpush1.bf16.msra.mxu0 0
    %401 = vmatprep.subr.bf16.mxu0 0
    %402 = vmatpush1.bf16.msra.mxu0 0
    %403 = vmatprep.subr.bf16.mxu0 0
    %404 = vmatpush1.bf16.msra.mxu0 0
    %405 = vmatprep.subr.bf16.mxu0 0
    %406 = vmatpush1.bf16.msra.mxu0 0
    %407 = vmatprep.subr.bf16.mxu0 0
    %408 = vmatpush1.bf16.msra.mxu0 0
    %409 = vmatprep.subr.bf16.mxu0 0
    %410 = vmatpush1.bf16.msra.mxu0 0
    %411 = vmatprep.mubr.bf16.mxu0 0
    %412 = vmatmul.mubr.bf16.gmra.mrb[0].mxu0 %v377
    %v413 = vpop.f32.mrb[0].mxu0
    %v414 = vadd.f32 0.0, %v413
    %v415 = vpop.f32.mrb[0].mxu0
    %v416 = vpop.f32.mrb[0].mxu0
    %v417 = vpop.f32.mrb[0].mxu0
    %418 = vdwg.mxu0
    %420 = vrot.lane.b32.xlu0 %v414, 32
    %v421 = vpop.permute.xlu0 %420
    %v423 = vsel %vm165, %v372, %v421
    %v424 = vpack.c.bf16 %v423, %v423
    %v425 = vld [vmem:[%s8] sm:$0xf]
    %v426 = vld [vmem:[%s8 + $0x4] sm:$0xf]
    %v427 = vld [vmem:[%s8 + $0x8] sm:$0xf]
    %v428 = vld [vmem:[%s8 + $0xc] sm:$0xf]
    %v429 = vld [vmem:[%s8 + $0x10] sm:$0xf]
    %v430 = vld [vmem:[%s8 + $0x14] sm:$0xf]
    %v431 = vld [vmem:[%s8 + $0x18] sm:$0xf]
    %v432 = vld [vmem:[%s8 + $0x1c] sm:$0xf]
    %v433 = vld [vmem:[%s9] sm:$0x1]
    %v435 = vlaneseq
    %v436 = vshrl.u32 %v435, 7
    %v437 = vsub.s32 0, %v436
    %v438 = vrot.slane %v433, %v437
    %v448 = vunpack.c.l.b16 %v425
    %v449 = vunpack.c.l.b16 %v426
    %v450 = vunpack.c.l.b16 %v427
    %v451 = vunpack.c.l.b16 %v428
    %v452 = vunpack.c.l.b16 %v429
    %v453 = vunpack.c.l.b16 %v430
    %v454 = vunpack.c.l.b16 %v431
    %v455 = vunpack.c.l.b16 %v432
    %v456 = vpack.c.b16 %v449, %v448
    %v457 = vpack.c.b16 %v451, %v450
    %v458 = vpack.c.b16 %v453, %v452
    %v459 = vpack.c.b16 %v455, %v454
    %v465 = vsel %vm63, %v424, 0
    %467 = vmatprep.subr.bf16.mxu0 0
    %468 = vmatpush1.bf16.msra.mxu0 %v456
    %469 = vmatprep.subr.bf16.mxu0 0
    %470 = vmatpush1.bf16.msra.mxu0 %v457
    %471 = vmatprep.subr.bf16.mxu0 0
    %472 = vmatpush1.bf16.msra.mxu0 %v458
    %473 = vmatprep.subr.bf16.mxu0 0
    %474 = vmatpush1.bf16.msra.mxu0 %v459
    %475 = vmatprep.subr.bf16.mxu0 0
    %476 = vmatpush1.bf16.msra.mxu0 0
    %477 = vmatprep.subr.bf16.mxu0 0
    %478 = vmatpush1.bf16.msra.mxu0 0
    %479 = vmatprep.subr.bf16.mxu0 0
    %480 = vmatpush1.bf16.msra.mxu0 0
    %481 = vmatprep.subr.bf16.mxu0 0
    %482 = vmatpush1.bf16.msra.mxu0 0
    %483 = vmatprep.subr.bf16.mxu0 0
    %484 = vmatpush1.bf16.msra.mxu0 0
    %485 = vmatprep.subr.bf16.mxu0 0
    %486 = vmatpush1.bf16.msra.mxu0 0
    %487 = vmatprep.subr.bf16.mxu0 0
    %488 = vmatpush1.bf16.msra.mxu0 0
    %489 = vmatprep.subr.bf16.mxu0 0
    %490 = vmatpush1.bf16.msra.mxu0 0
    %491 = vmatprep.subr.bf16.mxu0 0
    %492 = vmatpush1.bf16.msra.mxu0 0
    %493 = vmatprep.subr.bf16.mxu0 0
    %494 = vmatpush1.bf16.msra.mxu0 0
    %495 = vmatprep.subr.bf16.mxu0 0
    %496 = vmatpush1.bf16.msra.mxu0 0
    %497 = vmatprep.subr.bf16.mxu0 0
    %498 = vmatpush1.bf16.msra.mxu0 0
    %499 = vmatprep.mubr.bf16.mxu0 0
    %500 = vmatmul.mubr.bf16.gmra.mrb[0].mxu0 %v465
    %v501 = vpop.f32.mrb[0].mxu0
    %v502 = vadd.f32 %v438, %v501
    %v503 = vpop.f32.mrb[0].mxu0
    %v504 = vpop.f32.mrb[0].mxu0
    %v505 = vpop.f32.mrb[0].mxu0
    %506 = vdwg.mxu0
    %507 = vst [vmem:[#allocation2] sm:$0xff] %v502
    // Predicated region
    $region42: #{tpu_custom_call.1} parent=1 // pred_check
      _
    $region43: #{tpu_custom_call.1} parent=1 // pred_check_branch
      %509 = sbr.rel (0) target = $region45
    $region44: #{tpu_custom_call.1} parent=1 // pred_region
      %s511 = ssub.s32 128, 128
      %512 = vsyncadd [#allocation3], %s511
      %s514 = sshll.u32 [#allocation2], 4
      %s515 = int_to_ptr.vmem [resolvable:$true] %s514
      %517 = dma.vmem_to_hbm [thread:$0]  %s515, 128, %s10, [#allocation3]
    $region45: #{tpu_custom_call.1} parent=1 // pred_fallthru
      _
    // Predicated region
    $region46: #{tpu_custom_call.1} parent=1 // pred_check
      _
    $region47: #{tpu_custom_call.1} parent=1 // pred_check_branch
      %519 = sbr.rel (0) target = $region49
    $region48: #{tpu_custom_call.1} parent=1 // pred_region
      %520 = dma.done [#allocation3], 128
    $region49: #{tpu_custom_call.1} parent=1 // pred_fallthru
      _
    %521 = vsyncpa [#allocation3], 1

</llo_original>
